<compile_context>
chip_gen: v6e
topology: v6e:2x2x1
jax: 0.10.0
libtpu: 0.0.40
codegen_flags: <defaults>
</compile_context>

<pallas_src>
import functools

import jax
import jax.numpy as jnp
from jax.experimental import pallas as pl
from jax.experimental.pallas import tpu as pltpu


def _round_up(x, m):
    return (x + m - 1) // m * m


def _pow_one_minus(pt, gamma):
    """(1 - pt) ** gamma; cheap VPU multiplies for small integer gamma."""
    one_m = 1.0 - pt
    if float(gamma).is_integer() and 0.0 < gamma <= 4.0:
        f = one_m
        for _ in range(int(gamma) - 1):
            f = f * one_m
        return f
    return one_m ** gamma


# ---------------------------------------------------------------------------
# Kernel 1: class axis on sublanes, spatial axis on lanes  (N, C, H*W) layout.
# ---------------------------------------------------------------------------
def _focal_kernel_csub(x_ref, t_ref, *rest, gamma, hw, tw, c, has_alpha,
                       mask_cols):
    """One grid cell processes a (1, C, TW) logits tile.

    Writes a lane-resident (1, 1, 128) partial-sum vector into its private
    output block; the wrapper reduces the partials.  All grid axes are
    'parallel' (no resident accumulator).
    """
    if has_alpha:
        a_ref, out_ref = rest
    else:
        a_ref, out_ref = None, rest[0]

    x = x_ref[...].astype(jnp.float32)                  # (1, C, TW)
    t = t_ref[...]                                      # (1, 1, TW) int32

    # Numerically stable softmax pieces along the class (sublane) axis.
    # exp(z) is reused for pt, so exp runs only once per logit element.
    m = jnp.max(x, axis=1, keepdims=True)               # (1, 1, TW)
    z = x - m
    ez = jnp.exp(z)                                     # (1, C, TW)
    sum_ez = jnp.sum(ez, axis=1, keepdims=True)         # (1, 1, TW)

    # One-hot selection via select (no bool->f32 cast, no extra multiply);
    # the (1, C, 1) iota broadcasts inside the compare.
    # NOTE: out-of-range target ids contribute 0 loss instead of raising,
    # unlike torch.gather.
    cls = jax.lax.broadcasted_iota(jnp.int32, (1, c, 1), 1)
    sel = cls == t                                      # (1, C, TW) bool

    z_t = jnp.sum(jnp.where(sel, z, 0.0), axis=1, keepdims=True)
    logpt = z_t - jnp.log(sum_ez)                       # (1, 1, TW)

    if gamma != 0.0:
        ez_t = jnp.sum(jnp.where(sel, ez, 0.0), axis=1, keepdims=True)
        pt = ez_t / sum_ez                              # target softmax prob

    if has_alpha:
        a = a_ref[...].astype(jnp.float32)              # (1, C, 1)
        at = jnp.sum(jnp.where(sel, a, 0.0), axis=1, keepdims=True)
        logpt = logpt * at

    if gamma != 0.0:
        loss = -1.0 * _pow_one_minus(pt, gamma) * logpt
    else:
        loss = -1.0 * logpt                             # (1, 1, TW)

    if mask_cols:
        # Ragged last lane tile: zero padded / stale columns before summing.
        col = (jax.lax.broadcasted_iota(jnp.int32, loss.shape, 2)
               + pl.program_id(1) * tw)
        loss = jnp.where(col < hw, loss, 0.0)

    # Lane-resident partial: pairwise tree of aligned 128-lane VPU adds.
    chunks = [loss[:, :, kk * 128:(kk + 1) * 128] for kk in range(tw // 128)]
    while len(chunks) > 1:
        nxt = [a_ + b_ for a_, b_ in zip(chunks[0::2], chunks[1::2])]
        if len(chunks) % 2:
            nxt.append(chunks[-1])
        chunks = nxt
    out_ref[...] = chunks[0]                            # (1, 1, 128)


# ---------------------------------------------------------------------------
# Kernel 2: row-major (TM, C) tiles for 2-D inputs with C >= 128 (class on
# lanes) -- avoids the wrapper-side transpose on this bandwidth-bound path.
# ---------------------------------------------------------------------------
def _focal_kernel_clane(x_ref, t_ref, *rest, gamma, m_rows, tm, c, has_alpha,
                        mask_rows):
    if has_alpha:
        a_ref, out_ref = rest
    else:
        a_ref, out_ref = None, rest[0]

    x = x_ref[...].astype(jnp.float32)                  # (TM, C)
    t = t_ref[...]                                      # (TM, 1) int32

    mx = jnp.max(x, axis=1, keepdims=True)              # (TM, 1)
    z = x - mx
    ez = jnp.exp(z)
    sum_ez = jnp.sum(ez, axis=1, keepdims=True)

    cls = jax.lax.broadcasted_iota(jnp.int32, (1, c), 1)
    sel = cls == t                                      # (TM, C) bool

    z_t = jnp.sum(jnp.where(sel, z, 0.0), axis=1, keepdims=True)
    logpt = z_t - jnp.log(sum_ez)                       # (TM, 1)

    if gamma != 0.0:
        ez_t = jnp.sum(jnp.where(sel, ez, 0.0), axis=1, keepdims=True)
        pt = ez_t / sum_ez

    if has_alpha:
        a = a_ref[...].astype(jnp.float32)              # (1, C)
        at = jnp.sum(jnp.where(sel, a, 0.0), axis=1, keepdims=True)
        logpt = logpt * at

    if gamma != 0.0:
        loss = -1.0 * _pow_one_minus(pt, gamma) * logpt
    else:
        loss = -1.0 * logpt                             # (TM, 1)

    if mask_rows:
        row = (jax.lax.broadcasted_iota(jnp.int32, loss.shape, 0)
               + pl.program_id(0) * tm)
        loss = jnp.where(row < m_rows, loss, 0.0)

    partial = jnp.sum(loss)
    lane = jax.lax.broadcasted_iota(jnp.int32, (1, 1, 128), 2)
    out_ref[...] = jnp.where(lane == 0, partial, 0.0)


# ---------------------------------------------------------------------------
# Wrappers
# ---------------------------------------------------------------------------
def _build_alpha(alpha, c):
    if alpha is None:
        return None
    if isinstance(alpha, (float, int)) and not isinstance(alpha, bool):
        assert c == 2, "scalar alpha implies binary classification (C == 2)"
        return jnp.array([float(alpha), 1.0 - float(alpha)], jnp.float32)
    a = jnp.asarray(alpha, jnp.float32).reshape(-1)
    assert a.shape[0] == c, "alpha must provide one weight per class"
    return a


def _run_csub(x3, t3, avec, gamma, size_average, tile_budget_bytes):
    n, c, hw = x3.shape

    # Tile width from the *f32 in-kernel working set* (dtype independent):
    # ~6 (C, TW) f32 temporaries + 2x double-buffered logits block (8-sublane
    # padded) + 2x double-buffered target block.  Default budget fits v5e's
    # 16 MiB and v7x's 32 MiB default scoped VMEM with headroom.
    c_pad = _round_up(c, 8)
    bytes_per_lane = (6 + 2) * c_pad * 4 + 2 * 8 * 4
    hw_pad = _round_up(hw, 128)
    tw = max(128, (tile_budget_bytes // bytes_per_lane) // 128 * 128)
    tw = min(tw, hw_pad)
    # Keep >= 4 grid steps when possible so both v7x TensorCores get work.
    min_steps = 4
    if n * pl.cdiv(hw, tw) < min_steps:
        want_w = -(-min_steps // n)
        tw = min(tw, max(128, _round_up(-(-hw // want_w), 128)))

    grid_w = pl.cdiv(hw, tw)
    grid = (n, grid_w)
    num_tiles = n * grid_w
    has_alpha = avec is not None
    mask_cols = (hw % tw) != 0

    kern = functools.partial(_focal_kernel_csub, gamma=float(gamma), hw=hw,
                             tw=tw, c=c, has_alpha=has_alpha,
                             mask_cols=mask_cols)

    in_specs = [
        pl.BlockSpec((1, c, tw), lambda ni, wi: (ni, 0, wi)),   # logits
        pl.BlockSpec((1, 1, tw), lambda ni, wi: (ni, 0, wi)),   # targets
    ]
    args = [x3, t3]
    if has_alpha:
        in_specs.append(pl.BlockSpec((1, c, 1), lambda ni, wi: (0, 0, 0)))
        args.append(avec.reshape(1, c, 1))

    partials = pl.pallas_call(
        kern,
        out_shape=jax.ShapeDtypeStruct((num_tiles, 1, 128), jnp.float32),
        grid_spec=pltpu.PrefetchScalarGridSpec(
            num_scalar_prefetch=0,
            grid=grid,
            in_specs=in_specs,
            out_specs=pl.BlockSpec(
                (1, 1, 128), lambda ni, wi: (ni * grid_w + wi, 0, 0)),
        ),
        compiler_params=pltpu.CompilerParams(
            dimension_semantics=("parallel", "parallel")),
    )(*args)

    total = jnp.sum(partials)
    if size_average:
        return total / jnp.float32(n * hw)
    return total


def _run_clane(x2, t2, avec, gamma, size_average, tile_budget_bytes):
    m_rows, c = x2.shape

    c_lane = _round_up(c, 128)
    bytes_per_row = (6 + 2) * c_lane * 4 + 2 * 4
    tm = max(8, (tile_budget_bytes // bytes_per_row) // 8 * 8)
    tm = min(tm, _round_up(m_rows, 8))
    min_steps = 4
    if pl.cdiv(m_rows, tm) < min_steps:
        tm = min(tm, max(8, _round_up(-(-m_rows // min_steps), 8)))

    grid_m = pl.cdiv(m_rows, tm)
    has_alpha = avec is not None
    mask_rows = (m_rows % tm) != 0

    kern = functools.partial(_focal_kernel_clane, gamma=float(gamma),
                             m_rows=m_rows, tm=tm, c=c, has_alpha=has_alpha,
                             mask_rows=mask_rows)

    in_specs = [
        pl.BlockSpec((tm, c), lambda i: (i, 0)),                # logits
        pl.BlockSpec((tm, 1), lambda i: (i, 0)),                # targets
    ]
    args = [x2, t2]
    if has_alpha:
        in_specs.append(pl.BlockSpec((1, c), lambda i: (0, 0)))
        args.append(avec.reshape(1, c))

    partials = pl.pallas_call(
        kern,
        out_shape=jax.ShapeDtypeStruct((grid_m, 1, 128), jnp.float32),
        grid_spec=pltpu.PrefetchScalarGridSpec(
            num_scalar_prefetch=0,
            grid=(grid_m,),
            in_specs=in_specs,
            out_specs=pl.BlockSpec((1, 1, 128), lambda i: (i, 0, 0)),
        ),
        compiler_params=pltpu.CompilerParams(
            dimension_semantics=("parallel",)),
    )(*args)

    total = jnp.sum(partials)
    if size_average:
        return total / jnp.float32(m_rows)
    return total


def focal_loss(logits, target, *, gamma=0.0, alpha=None, size_average=True,
               tile_budget_bytes=6 << 20):
    """Pallas FocalLoss forward. Returns a float32 scalar.

    logits: (N, C, H, W) / (N, C, *spatial) consumed in native layout, or
            (M, C).
    target: integer class ids with N*prod(spatial) (or M) elements.
    alpha : None, scalar (binary -> [alpha, 1-alpha], requires C==2), or a
            length-C list/array.
    """
    if logits.ndim > 2:
        n, c = logits.shape[0], logits.shape[1]
        hw = 1
        for d in logits.shape[2:]:
            hw *= d
        x3 = logits.reshape(n, c, hw)                    # free reshape
        t3 = target.reshape(n, 1, hw).astype(jnp.int32)
        avec = _build_alpha(alpha, c)
        return _run_csub(x3, t3, avec, gamma, size_average, tile_budget_bytes)

    m_rows, c = logits.shape
    t = target.reshape(-1).astype(jnp.int32)
    avec = _build_alpha(alpha, c)
    if c >= 128:
        # Class axis already lane-dense: row-tiled kernel, no HBM transpose.
        return _run_clane(logits, t.reshape(m_rows, 1), avec, gamma,
                          size_average, tile_budget_bytes)
    # Small C: one transpose to put the (large) row axis on lanes.
    x3 = jnp.transpose(logits, (1, 0)).reshape(1, c, m_rows)
    t3 = t.reshape(1, 1, m_rows)
    return _run_csub(x3, t3, avec, gamma, size_average, tile_budget_bytes)


def _focal_loss_ref(logits, target, *, gamma, alpha, size_average):
    """Pure-JAX reference mirroring the PyTorch module (for verification)."""
    if logits.ndim > 2:
        c = logits.shape[1]
        x2 = jnp.moveaxis(
            logits.reshape(logits.shape[0], c, -1), 1, 2).reshape(-1, c)
    else:
        x2 = logits
        c = logits.shape[1]
    t = target.reshape(-1).astype(jnp.int32)
    logp = jax.nn.log_softmax(x2.astype(jnp.float32), axis=1)
    logpt = jnp.take_along_axis(logp, t[:, None], axis=1)[:, 0]
    pt = jnp.exp(logpt)
    if alpha is not None:
        if isinstance(alpha, (float, int)):
            avec = jnp.array([float(alpha), 1.0 - float(alpha)], jnp.float32)
        else:
            avec = jnp.asarray(alpha, jnp.float32)
        logpt = logpt * avec[t]
    loss = -1.0 * (1.0 - pt) ** float(gamma) * logpt
    return loss.mean() if size_average else loss.sum()


if __name__ == "__main__":
    key = jax.random.PRNGKey(0)
    ks = jax.random.split(key, 8)

    # 1) 4-D NCHW, gamma=2, per-class alpha, mean (main module use-case).
    N, C, H, W = 2, 4, 16, 16
    x = jax.random.normal(ks[0], (N, C, H, W), dtype=jnp.float32)
    tgt = jax.random.randint(ks[1], (N, H, W), 0, C, dtype=jnp.int32)
    alpha1 = [0.25, 0.25, 0.25, 0.25]
    out = jax.block_until_ready(
        focal_loss(x, tgt, gamma=2.0, alpha=alpha1, size_average=True))
    ref = _focal_loss_ref(x, tgt, gamma=2.0, alpha=alpha1, size_average=True)
    assert jnp.allclose(out, ref, rtol=2e-5, atol=1e-6), (out, ref)

    # 2) 4-D NCHW with ragged spatial tile, gamma=0, no alpha, sum.
    x2 = jax.random.normal(ks[2], (2, 4, 16, 15), dtype=jnp.float32)
    t2 = jax.random.randint(ks[3], (2, 16, 15), 0, 4, dtype=jnp.int32)
    out2 = jax.block_until_ready(
        focal_loss(x2, t2, gamma=0.0, alpha=None, size_average=False))
    ref2 = _focal_loss_ref(x2, t2, gamma=0.0, alpha=None, size_average=False)
    assert jnp.allclose(out2, ref2, rtol=2e-5, atol=1e-4), (out2, ref2)

    # 3) 2-D (M, C) with C >= 128: row-major lane-class kernel (no transpose),
    #    ragged row tile, per-class alpha.
    M3, C3 = 100, 128
    x3 = jax.random.normal(ks[4], (M3, C3), dtype=jnp.float32)
    t3 = jax.random.randint(ks[5], (M3,), 0, C3, dtype=jnp.int32)
    a3 = [0.5 + 0.5 * (i % 2) for i in range(C3)]
    out3 = jax.block_until_ready(
        focal_loss(x3, t3, gamma=2.0, alpha=a3, size_average=True))
    ref3 = _focal_loss_ref(x3, t3, gamma=2.0, alpha=a3, size_average=True)
    assert jnp.allclose(out3, ref3, rtol=2e-5, atol=1e-6), (out3, ref3)

    # 4) 2-D (M, C) with small C (transpose fallback), non-integer gamma, sum.
    x4 = jax.random.normal(ks[6], (96, 32), dtype=jnp.float32)
    t4 = jax.random.randint(ks[7], (96,), 0, 32, dtype=jnp.int32)
    out4 = jax.block_until_ready(
        focal_loss(x4, t4, gamma=0.5, alpha=None, size_average=False))
    ref4 = _focal_loss_ref(x4, t4, gamma=0.5, alpha=None, size_average=False)
    assert jnp.allclose(out4, ref4, rtol=2e-5, atol=1e-4), (out4, ref4)

    # 5) Scalar alpha (binary classification) path.
    x5 = jax.random.normal(ks[0], (1, 2, 8, 8), dtype=jnp.float32)
    t5 = jax.random.randint(ks[1], (1, 8, 8), 0, 2, dtype=jnp.int32)
    out5 = jax.block_until_ready(
        focal_loss(x5, t5, gamma=2.0, alpha=0.25, size_average=True))
    ref5 = _focal_loss_ref(x5, t5, gamma=2.0, alpha=0.25, size_average=True)
    assert jnp.allclose(out5, ref5, rtol=2e-5, atol=1e-6), (out5, ref5)

    print("KERNEL_OK")
</pallas_src>

<mosaic_0001>
module attributes {stable_mosaic.version = 11 : i64} {
  func.func @_focal_kernel_csub(%arg0: i32, %arg1: i32, %arg2: memref<1x4x128xf32, #tpu.memory_space<vmem>>, %arg3: memref<1x1x128xi32, #tpu.memory_space<vmem>>, %arg4: memref<1x4x1xf32, #tpu.memory_space<vmem>>, %arg5: memref<1x1x128xf32, #tpu.memory_space<vmem>>) attributes {dimension_semantics = [#tpu.dimension_semantics<parallel>, #tpu.dimension_semantics<parallel>], iteration_bounds = array<i64: 2, 2>, scalar_prefetch = 0 : i64, scratch_operands = 0 : i64, tpu.core_type = #tpu.core_type<tc>, window_params = [{transform_indices = @transform_0, window_bounds = array<i64: 1, 4, 128>}, {transform_indices = @transform_1, window_bounds = array<i64: 1, 1, 128>}, {pipeline_mode = #tpu.pipeline_mode<synchronous>, transform_indices = @transform_2, window_bounds = array<i64: 1, 4, 1>}, {transform_indices = @transform_3, window_bounds = array<i64: 1, 1, 128>}]} {
    %c0 = arith.constant 0 : index
    %c0_0 = arith.constant 0 : index
    %c0_1 = arith.constant 0 : index
    %0 = vector.load %arg2[%c0, %c0_0, %c0_1] : memref<1x4x128xf32, #tpu.memory_space<vmem>>, vector<1x4x128xf32>
    %c0_2 = arith.constant 0 : index
    %c0_3 = arith.constant 0 : index
    %c0_4 = arith.constant 0 : index
    %1 = vector.load %arg3[%c0_2, %c0_3, %c0_4] : memref<1x1x128xi32, #tpu.memory_space<vmem>>, vector<1x1x128xi32>
    %cst = arith.constant dense<0xFF800000> : vector<1x128xf32>
    %2 = vector.multi_reduction <maximumf>, %0, %cst [1] : vector<1x4x128xf32> to vector<1x128xf32>
    %3 = vector.shape_cast %2 : vector<1x128xf32> to vector<1x1x128xf32>
    %4 = vector.broadcast %3 : vector<1x1x128xf32> to vector<1x4x128xf32>
    %5 = arith.subf %0, %4 : vector<1x4x128xf32>
    %6 = math.exp %5 : vector<1x4x128xf32>
    %cst_5 = arith.constant dense<0.000000e+00> : vector<1x128xf32>
    %7 = vector.multi_reduction <add>, %6, %cst_5 [1] : vector<1x4x128xf32> to vector<1x128xf32>
    %8 = vector.shape_cast %7 : vector<1x128xf32> to vector<1x1x128xf32>
    %9 = tpu.iota {dimensions = array<i32: 1>} : vector<1x4x1xi32>
    %10 = vector.broadcast %9 : vector<1x4x1xi32> to vector<1x4x128xi32>
    %11 = vector.broadcast %1 : vector<1x1x128xi32> to vector<1x4x128xi32>
    %12 = arith.cmpi eq, %10, %11 : vector<1x4x128xi32>
    %cst_6 = arith.constant 0.000000e+00 : f32
    %13 = vector.broadcast %cst_6 : f32 to vector<1x4x128xf32>
    %14 = arith.select %12, %5, %13 : vector<1x4x128xi1>, vector<1x4x128xf32>
    %cst_7 = arith.constant dense<0.000000e+00> : vector<1x128xf32>
    %15 = vector.multi_reduction <add>, %14, %cst_7 [1] : vector<1x4x128xf32> to vector<1x128xf32>
    %16 = vector.shape_cast %15 : vector<1x128xf32> to vector<1x1x128xf32>
    %17 = math.log %8 : vector<1x1x128xf32>
    %18 = arith.subf %16, %17 : vector<1x1x128xf32>
    %cst_8 = arith.constant 0.000000e+00 : f32
    %19 = vector.broadcast %cst_8 : f32 to vector<1x4x128xf32>
    %20 = arith.select %12, %6, %19 : vector<1x4x128xi1>, vector<1x4x128xf32>
    %cst_9 = arith.constant dense<0.000000e+00> : vector<1x128xf32>
    %21 = vector.multi_reduction <add>, %20, %cst_9 [1] : vector<1x4x128xf32> to vector<1x128xf32>
    %22 = vector.shape_cast %21 : vector<1x128xf32> to vector<1x1x128xf32>
    %23 = arith.divf %22, %8 : vector<1x1x128xf32>
    %c0_10 = arith.constant 0 : index
    %c0_11 = arith.constant 0 : index
    %c0_12 = arith.constant 0 : index
    %24 = vector.load %arg4[%c0_10, %c0_11, %c0_12] : memref<1x4x1xf32, #tpu.memory_space<vmem>>, vector<1x4x1xf32>
    %cst_13 = arith.constant 0.000000e+00 : f32
    %25 = vector.shape_cast %24 : vector<1x4x1xf32> to vector<1x4x1xf32>
    %26 = vector.broadcast %25 : vector<1x4x1xf32> to vector<1x4x128xf32>
    %27 = vector.broadcast %cst_13 : f32 to vector<1x4x128xf32>
    %28 = arith.select %12, %26, %27 : vector<1x4x128xi1>, vector<1x4x128xf32>
    %cst_14 = arith.constant dense<0.000000e+00> : vector<1x128xf32>
    %29 = vector.multi_reduction <add>, %28, %cst_14 [1] : vector<1x4x128xf32> to vector<1x128xf32>
    %30 = vector.shape_cast %29 : vector<1x128xf32> to vector<1x1x128xf32>
    %31 = arith.mulf %18, %30 : vector<1x1x128xf32>
    %cst_15 = arith.constant 1.000000e+00 : f32
    %32 = vector.broadcast %cst_15 : f32 to vector<1x1x128xf32>
    %33 = arith.subf %32, %23 : vector<1x1x128xf32>
    %34 = arith.mulf %33, %33 : vector<1x1x128xf32>
    %cst_16 = arith.constant -1.000000e+00 : f32
    %35 = vector.broadcast %cst_16 : f32 to vector<1x1x128xf32>
    %36 = arith.mulf %35, %34 : vector<1x1x128xf32>
    %37 = arith.mulf %36, %31 : vector<1x1x128xf32>
    %c0_17 = arith.constant 0 : index
    %c0_18 = arith.constant 0 : index
    %c0_19 = arith.constant 0 : index
    %38 = vector.load %arg5[%c0_17, %c0_18, %c0_19] : memref<1x1x128xf32, #tpu.memory_space<vmem>>, vector<1x1x128xf32>
    tpu.vector_store %arg5[%c0_17, %c0_18, %c0_19], %37 {strides = array<i32>} : memref<1x1x128xf32, #tpu.memory_space<vmem>>, vector<1x1x128xf32>,
    return
  }
  func.func @transform_0(%arg0: i32, %arg1: i32) -> (i32, i32, i32) {
    %c0_i32 = arith.constant 0 : i32
    %c0_i32_0 = arith.constant 0 : i32
    return %arg0, %c0_i32, %arg1 : i32, i32, i32
  }
  func.func @transform_1(%arg0: i32, %arg1: i32) -> (i32, i32, i32) {
    %c0_i32 = arith.constant 0 : i32
    %c0_i32_0 = arith.constant 0 : i32
    return %arg0, %c0_i32, %arg1 : i32, i32, i32
  }
  func.func @transform_2(%arg0: i32, %arg1: i32) -> (i32, i32, i32) {
    %c0_i32 = arith.constant 0 : i32
    %c0_i32_0 = arith.constant 0 : i32
    %c0_i32_1 = arith.constant 0 : i32
    %c0_i32_2 = arith.constant 0 : i32
    return %c0_i32, %c0_i32_0, %c0_i32_1 : i32, i32, i32
  }
  func.func @transform_3(%arg0: i32, %arg1: i32) -> (i32, i32, i32) {
    %c2_i32 = arith.constant 2 : i32
    %0 = arith.muli %arg0, %c2_i32 : i32
    %1 = arith.addi %0, %arg1 : i32
    %c0_i32 = arith.constant 0 : i32
    %c0_i32_0 = arith.constant 0 : i32
    %c0_i32_1 = arith.constant 0 : i32
    return %1, %c0_i32, %c0_i32_0 : i32, i32, i32
  }
}

</mosaic_0001>

<llo_original>
// kernel: tpu_custom_call.1
$region0: #{tpu_custom_call.1}
  #allocation0 [shape = 'u32[]', space=smem, size = 0x4, offset = 0x4, fixed_abs, tag = 'smem constant byte address 0x4 - core index']
  #allocation1 [shape = 'u32[144,128]{1,0:T(1,128)}', space=vmem, size = 0x12000, scoped, tag = 'internal scratch']
  %s0 = inlined_call_operand.hbm [shape: f32[2,4,256], index: 0, kind: input, shape index: {}]
  %s1 = inlined_call_operand.vmem [shape: s32[2,1,256], index: 1, kind: input, shape index: {}]
  %s2 = inlined_call_operand.vmem [shape: f32[1,4,1], index: 2, kind: input, shape index: {}]
  %s3 = inlined_call_operand.hbm [shape: f32[4,1,128], index: 3, kind: output, shape index: {}]
  %s4 = sld [smem:[#allocation0]]
  $region49: #{tpu_custom_call.1} parent=0
    _
  %s6 = ssub.s32 1, %s4
  %s7 = scalar_select 0, %s6, %s4
  $region1: #{tpu_custom_call.1} parent=0
    #allocation2 [shape = 'u8[4096]{0}', space=vmem, size = 0x1000, scoped, tag = 'input window, operand 0']
    #allocation3 [shape = 's32[2]{0}', space=sflag, size = 0x8, scoped, tag = 'scoped memory for tpu_custom_call.1']
    #allocation4 [shape = 's32[2]{0}', space=sflag, size = 0x8, scoped, tag = 'scoped memory for tpu_custom_call.1']
    #allocation5 [shape = 'u8[1024]{0}', space=vmem, size = 0x400, scoped, tag = 'output window, operand 0']
    %8 = vsyncpa [#allocation3], 0
    %s9 = scalar_lea.sflag [#allocation3], 1
    %10 = vsyncpa %s9, 0
    %11 = vsyncpa [#allocation4], 0
    %s12 = scalar_lea.sflag [#allocation4], 1
    %13 = vsyncpa %s12, 0
    loop: start=0, step=1, limit=6
    $region2: #{tpu_custom_call.1} parent=1 // loop_pre_header
      _
    $region3: #{tpu_custom_call.1} parent=1 // loop_header
      %s15 = sphi 0, %s19
      %p16 = scmp.ge.s32.totalorder %s15, 6
      %s22 = sphi 0, %s34
      %s23 = sphi 0, %s30
      %s24 = sphi 0, %s22
      %s25 = sphi 0, %s23
      %s26 = sphi 0, %s24
      %s27 = sphi 0, %s25
      %s39 = sphi 0, %s41
      %s42 = sphi 0, %s39
      %s43 = sphi 0, %s42
      %s59 = sphi 0, %s43
      %s67 = sphi 0, %s69
      %s70 = sphi 0, %s67
      %s71 = sphi 0, %s70
      %s87 = sphi 0, %s71
      %s91 = sphi 0, %s91
      %s93 = sphi 0, %s91
      %s94 = sphi 0, %s93
      %s108 = sphi 0, %s94
      %s118 = sphi 0, %s120
      %s121 = sphi 0, %s118
      %s122 = sphi 0, %s121
      %s138 = sphi 0, %s122
    $region4: #{tpu_custom_call.1} parent=1 // loop_header_branch
      %18 = sbr.rel (%p16) target = $region8
    $region5: #{tpu_custom_call.1} parent=1 // loop_body
      %s20 = ssub.s32 %s15, 1
      %s21 = ssub.s32 %s15, 2
      %s28 = sadd.s32 1, %s23
      %p29 = scmp.ge.s32.totalorder %s28, 2
      %s30 = scalar_select %p29, 0, %s28
      %s31 = sadd.s32 1, %s22
      %s32 = scalar_select %p29, %s31, %s22
      %p33 = scmp.ge.s32.totalorder %s32, 2
      %s34 = scalar_select %p33, 0, %s32
      %s35 = ssub.s32 %s22, %s34
      %s36 = ssub.s32 %s23, %s30
      %s37 = sor.u32 %s35, %s36
      %p38 = scmp.eq.s32.totalorder %s37, 0
      %s40 = sadd.s32 %s39, 1
      %s41 = scalar_select %p38, %s39, %s40
      %p44 = pneg %p38
      %p45 = scmp.eq.s32.totalorder %s15, 3
      %p46 = por %p44, %p45
      %p47 = scmp.ne.s32.totalorder %s39, %s42
      %p48 = scmp.eq.s32.totalorder %s15, 0
      %p49 = por %p47, %p48
      %p50 = scmp.ne.s32.totalorder %s39, %s42
      %p51 = scmp.eq.s32.totalorder %s20, 3
      %p52 = por %p50, %p51
      %p53 = scmp.ne.s32.totalorder %s42, %s43
      %p54 = scmp.eq.s32.totalorder %s20, 0
      %p55 = por %p53, %p54
      %p56 = scmp.ne.s32.totalorder %s42, %s43
      %p57 = scmp.eq.s32.totalorder %s21, 3
      %p58 = por %p56, %p57
      %p60 = scmp.ne.s32.totalorder %s43, %s59
      %p61 = scmp.eq.s32.totalorder %s21, 0
      %p62 = por %p60, %p61
      %s63 = ssub.s32 %s22, %s34
      %s64 = ssub.s32 %s23, %s30
      %s65 = sor.u32 %s63, %s64
      %p66 = scmp.eq.s32.totalorder %s65, 0
      %s68 = sadd.s32 %s67, 1
      %s69 = scalar_select %p66, %s67, %s68
      %p72 = pneg %p66
      %p73 = scmp.eq.s32.totalorder %s15, 3
      %p74 = por %p72, %p73
      %p75 = scmp.ne.s32.totalorder %s67, %s70
      %p76 = scmp.eq.s32.totalorder %s15, 0
      %p77 = por %p75, %p76
      %p78 = scmp.ne.s32.totalorder %s67, %s70
      %p79 = scmp.eq.s32.totalorder %s20, 3
      %p80 = por %p78, %p79
      %p81 = scmp.ne.s32.totalorder %s70, %s71
      %p82 = scmp.eq.s32.totalorder %s20, 0
      %p83 = por %p81, %p82
      %p84 = scmp.ne.s32.totalorder %s70, %s71
      %p85 = scmp.eq.s32.totalorder %s21, 3
      %p86 = por %p84, %p85
      %p88 = scmp.ne.s32.totalorder %s71, %s87
      %p89 = scmp.eq.s32.totalorder %s21, 0
      %p90 = por %p88, %p89
      %s92 = sadd.s32 %s91, 1
      %p95 = scmp.eq.s32.totalorder %s15, 3
      %p96 = scmp.ne.s32.totalorder %s91, %s93
      %p97 = scmp.eq.s32.totalorder %s15, 0
      %p98 = por %p96, %p97
      %p99 = scmp.ne.s32.totalorder %s91, %s93
      %p100 = scmp.eq.s32.totalorder %s20, 3
      %p101 = por %p99, %p100
      %p102 = scmp.ne.s32.totalorder %s93, %s94
      %p103 = scmp.eq.s32.totalorder %s20, 0
      %p104 = por %p102, %p103
      %p105 = scmp.ne.s32.totalorder %s93, %s94
      %p106 = scmp.eq.s32.totalorder %s21, 3
      %p107 = por %p105, %p106
      %p109 = scmp.ne.s32.totalorder %s94, %s108
      %p110 = scmp.eq.s32.totalorder %s21, 0
      %p111 = por %p109, %p110
      %s112 = smul.u32 %s22, 2
      %s113 = sadd.s32 %s112, %s23
      %s114 = smul.u32 %s34, 2
      %s115 = sadd.s32 %s114, %s30
      %s116 = ssub.s32 %s113, %s115
      %p117 = scmp.eq.s32.totalorder %s116, 0
      %s119 = sadd.s32 %s118, 1
      %s120 = scalar_select %p117, %s118, %s119
      %p123 = pneg %p117
      %p124 = scmp.eq.s32.totalorder %s15, 3
      %p125 = por %p123, %p124
      %p126 = scmp.ne.s32.totalorder %s118, %s121
      %p127 = scmp.eq.s32.totalorder %s15, 0
      %p128 = por %p126, %p127
      %p129 = scmp.ne.s32.totalorder %s118, %s121
      %p130 = scmp.eq.s32.totalorder %s20, 3
      %p131 = por %p129, %p130
      %p132 = scmp.ne.s32.totalorder %s121, %s122
      %p133 = scmp.eq.s32.totalorder %s20, 0
      %p134 = por %p132, %p133
      %p135 = scmp.ne.s32.totalorder %s121, %s122
      %p136 = scmp.eq.s32.totalorder %s21, 3
      %p137 = por %p135, %p136
      %p139 = scmp.ne.s32.totalorder %s122, %s138
      %p140 = scmp.eq.s32.totalorder %s21, 0
      %p141 = por %p139, %p140
      %p142 = scmp.le.s32.totalorder 1, %s15
      %p143 = scmp.lt.s32.totalorder %s15, 5
      %p144 = pnand %p142, %p143
      %p145 = pneg %p144
      // Predicated region
      $region9: #{tpu_custom_call.1} parent=5 // pred_check
        _
      $region10: #{tpu_custom_call.1} parent=5 // pred_check_branch
        %147 = sbr.rel (%p144) target = $region12
      $region11: #{tpu_custom_call.1} parent=5 // pred_region
        %s148 = ssub.s32 %s15, 1
        // Predicated region
        $region13: #{tpu_custom_call.1} parent=11 // pred_check
          %p149 = pneg %p104
        $region14: #{tpu_custom_call.1} parent=11 // pred_check_branch
          %151 = sbr.rel (%p149) target = $region16
        $region15: #{tpu_custom_call.1} parent=11 // pred_region
          _
        $region16: #{tpu_custom_call.1} parent=11 // pred_fallthru
          _
      $region12: #{tpu_custom_call.1} parent=5 // pred_fallthru
        _
      %p152 = scmp.lt.s32.totalorder %s15, 4
      // Predicated region
      $region17: #{tpu_custom_call.1} parent=5 // pred_check
        %p153 = pneg %p152
      $region18: #{tpu_custom_call.1} parent=5 // pred_check_branch
        %155 = sbr.rel (%p153) target = $region20
      $region19: #{tpu_custom_call.1} parent=5 // pred_region
        // Predicated region
        $region21: #{tpu_custom_call.1} parent=19 // pred_check
          %p156 = pneg %p49
        $region22: #{tpu_custom_call.1} parent=19 // pred_check_branch
          %158 = sbr.rel (%p156) target = $region24
        $region23: #{tpu_custom_call.1} parent=19 // pred_region
          %s159 = sand.u32 %s39, 1
          %s160 = scalar_lea.sflag [#allocation3], %s159
          %s161 = sand.u32 %s39, 1
          %s162 = smul.addr %s161, 4
          %s163 = scalar_lea.vmem [#allocation2], %s162
          %s165 = ssub.s32 64, 64
          %166 = vsyncadd %s160, %s165
          %s167 = smul.addr %s22, 2
          %s168 = sadd.s32 %s23, %s167
          %s169 = smul.addr %s168, 64
          %s170 = scalar_lea.hbm %s0, %s169
          %s172 = sshll.u32 %s163, 4
          %s173 = int_to_ptr.vmem [resolvable:$true] %s172
          %175 = dma.hbm_to_vmem [thread:$0]  %s170, 64, %s173, %s160
        $region24: #{tpu_custom_call.1} parent=19 // pred_fallthru
          _
        // Predicated region
        $region25: #{tpu_custom_call.1} parent=19 // pred_check
          %p176 = pneg %p77
        $region26: #{tpu_custom_call.1} parent=19 // pred_check_branch
          %178 = sbr.rel (%p176) target = $region28
        $region27: #{tpu_custom_call.1} parent=19 // pred_region
          %p179 = scmp.lt.s32.totalorder %s22, 1
          %s180 = scalar_select %p179, %s22, 1
          %p181 = scmp.lt.s32.totalorder %s23, 1
          %s182 = scalar_select %p181, %s23, 1
          %s183 = smul.addr %s180, 2
          %s184 = sadd.s32 %s182, %s183
          %s185 = scalar_lea.vmem %s1, %s184
        $region28: #{tpu_custom_call.1} parent=19 // pred_fallthru
          _
      $region20: #{tpu_custom_call.1} parent=5 // pred_fallthru
        _
      %p186 = scmp.le.s32.totalorder 1, %s15
      %p187 = scmp.lt.s32.totalorder %s15, 5
      %p188 = pnand %p186, %p187
      %p189 = pneg %p188
      // Predicated region
      $region29: #{tpu_custom_call.1} parent=5 // pred_check
        _
      $region30: #{tpu_custom_call.1} parent=5 // pred_check_branch
        %191 = sbr.rel (%p188) target = $region32
      $region31: #{tpu_custom_call.1} parent=5 // pred_region
        %s192 = ssub.s32 %s15, 1
        %s193 = sand.u32 %s42, 1
        %s194 = scalar_lea.sflag [#allocation3], %s193
        %s195 = sand.u32 %s42, 1
        %s196 = smul.addr %s195, 4
        %s197 = scalar_lea.vmem [#allocation2], %s196
        // Predicated region
        $region33: #{tpu_custom_call.1} parent=31 // pred_check
          %p198 = pneg %p55
        $region34: #{tpu_custom_call.1} parent=31 // pred_check_branch
          %200 = sbr.rel (%p198) target = $region36
        $region35: #{tpu_custom_call.1} parent=31 // pred_region
          %201 = dma.done %s194, 64
        $region36: #{tpu_custom_call.1} parent=31 // pred_fallthru
          _
        %s202 = sand.u32 %s42, 1
        %s203 = scalar_lea.sflag [#allocation3], %s202
        %s204 = sand.u32 %s42, 1
        %s205 = smul.addr %s204, 4
        %s206 = scalar_lea.vmem [#allocation2], %s205
        %p207 = pneg %p55
        %p208 = pneg %p52
        %p209 = scmp.lt.s32.totalorder %s24, 1
        %s210 = scalar_select %p209, %s24, 1
        %p211 = scmp.lt.s32.totalorder %s25, 1
        %s212 = scalar_select %p211, %s25, 1
        %s213 = smul.addr %s210, 2
        %s214 = sadd.s32 %s212, %s213
        %s215 = scalar_lea.vmem %s1, %s214
        %p216 = pneg %p83
        %p217 = pneg %p80
        %p218 = pneg %p104
        %p219 = pneg %p101
        %p220 = pneg %p134
        %p221 = pneg %p131
        %s222 = sand.u32 %s121, 1
        %s223 = scalar_lea.sflag [#allocation4], %s222
        %s224 = sand.u32 %s121, 1
        %s225 = scalar_lea.vmem [#allocation5], %s224
        %p226 = scmp.lt.s32.totalorder %s24, 1
        %s227 = scalar_select %p226, %s24, 1
        %p228 = scmp.lt.s32.totalorder %s25, 1
        %s229 = scalar_select %p228, %s25, 1
        %s230 = smul.addr %s227, 2
        %s231 = sadd.s32 %s229, %s230
        %s232 = scalar_lea.vmem %s1, %s231
        %s233 = smul.u32 %s24, 2
        %s234 = sadd.s32 %s233, %s25
        %v235 = vld [vmem:[%s197] sm:$0xf]
        %v236 = vld [vmem:[%s232] sm:$0x1]
        %vm237 = vcmask 1043456
        %v238 = vsel %vm237, %v235, -inf
        %v239 = vrot.slane %v238, 4
        %v240 = vmax.f32 %v238, %v239
        %v241 = vrot.slane %v240, 2
        %v242 = vmax.f32 %v240, %v241
        %v243 = vrot.slane %v242, 1
        %v244 = vmax.f32 %v242, %v243
        %v245 = vsub.f32 %v235, %v244
        %v246 = vmul.f32 %v245, 1.442695
        %v247 = vpow.pop %v246
        %v248 = vsel %vm237, %v247, 0.0
        %v249 = vrot.slane %v248, 4
        %v250 = vadd.f32 %v248, %v249
        %v251 = vrot.slane %v250, 2
        %v252 = vadd.f32 %v250, %v251
        %v253 = vrot.slane %v252, 1
        %v254 = vadd.f32 %v252, %v253
        %v255 = vlaneseq
        %v256 = vshrl.u32 %v255, 7
        %v257 = vlaneseq
        %v258 = vshrl.u32 %v257, 7
        %v259 = vsub.s32 0, %v258
        %v260 = vrot.slane %v236, %v259
        %vm261 = vcmp.eq.s32.totalorder %v256, %v260
        %v262 = vsel %vm261, %v245, 0.0
        %v263 = vsel %vm237, %v262, 0.0
        %v264 = vrot.slane %v263, 4
        %v265 = vadd.f32 %v263, %v264
        %v266 = vrot.slane %v265, 2
        %v267 = vadd.f32 %v265, %v266
        %v268 = vrot.slane %v267, 1
        %v269 = vadd.f32 %v267, %v268
        %v270 = vlog2.pop %v254
        %v271 = vmul.f32 %v270, 0.6931472
        %v272 = vsub.f32 %v269, %v271
        %v273 = vsel %vm261, %v247, 0.0
        %v274 = vsel %vm237, %v273, 0.0
        %v275 = vrot.slane %v274, 4
        %v276 = vadd.f32 %v274, %v275
        %v277 = vrot.slane %v276, 2
        %v278 = vadd.f32 %v276, %v277
        %v279 = vrot.slane %v278, 1
        %v280 = vadd.f32 %v278, %v279
        %v281 = vrcp.pop %v254
        %v282 = vmul.f32 %v280, %v281
        %v283 = vld [vmem:[%s2] sm:$0xf]
        %285 = vset.pattern.permute.xlu0 0
        %286 = vperm.xlu0 %285, %v283
        %v287 = vpop.permute.xlu0 %286
        %v289 = vsel %vm261, %v287, 0.0
        %v290 = vsel %vm237, %v289, 0.0
        %v291 = vrot.slane %v290, 4
        %v292 = vadd.f32 %v290, %v291
        %v293 = vrot.slane %v292, 2
        %v294 = vadd.f32 %v292, %v293
        %v295 = vrot.slane %v294, 1
        %v296 = vadd.f32 %v294, %v295
        %v297 = vmul.f32 %v272, %v296
        %v298 = vsub.f32 1.0, %v282
        %v299 = vmul.f32 %v298, %v298
        %v300 = vmul.f32 %v299, -1.0
        %v301 = vmul.f32 %v300, %v297
        %302 = vst [vmem:[%s225] sm:$0x1] %v301
        %s303 = sand.u32 %s121, 1
        %s304 = scalar_lea.sflag [#allocation4], %s303
        %s305 = sand.u32 %s121, 1
        %s306 = scalar_lea.vmem [#allocation5], %s305
        // Predicated region
        $region37: #{tpu_custom_call.1} parent=31 // pred_check
          %p307 = pneg %p131
        $region38: #{tpu_custom_call.1} parent=31 // pred_check_branch
          %309 = sbr.rel (%p307) target = $region40
        $region39: #{tpu_custom_call.1} parent=31 // pred_region
          %s310 = smul.u32 %s24, 2
          %s311 = sadd.s32 %s310, %s25
          %s313 = ssub.s32 16, 16
          %314 = vsyncadd %s304, %s313
          %s315 = smul.addr %s311, 16
          %s316 = scalar_lea.hbm %s3, %s315
          %s318 = sshll.u32 %s306, 4
          %s319 = int_to_ptr.vmem [resolvable:$true] %s318
          %321 = dma.vmem_to_hbm [thread:$0]  %s319, 16, %s316, %s304
        $region40: #{tpu_custom_call.1} parent=31 // pred_fallthru
          _
      $region32: #{tpu_custom_call.1} parent=5 // pred_fallthru
        _
      %p322 = scmp.le.s32.totalorder 2, %s15
      // Predicated region
      $region41: #{tpu_custom_call.1} parent=5 // pred_check
        %p323 = pneg %p322
      $region42: #{tpu_custom_call.1} parent=5 // pred_check_branch
        %325 = sbr.rel (%p323) target = $region44
      $region43: #{tpu_custom_call.1} parent=5 // pred_region
        %s326 = ssub.s32 %s15, 2
        // Predicated region
        $region45: #{tpu_custom_call.1} parent=43 // pred_check
          %p327 = pneg %p137
        $region46: #{tpu_custom_call.1} parent=43 // pred_check_branch
          %329 = sbr.rel (%p327) target = $region48
        $region47: #{tpu_custom_call.1} parent=43 // pred_region
          %s330 = sand.u32 %s122, 1
          %s331 = scalar_lea.sflag [#allocation4], %s330
          %s332 = sand.u32 %s122, 1
          %s333 = scalar_lea.vmem [#allocation5], %s332
          %334 = dma.done %s331, 16
        $region48: #{tpu_custom_call.1} parent=43 // pred_fallthru
          _
      $region44: #{tpu_custom_call.1} parent=5 // pred_fallthru
        _
    $region6: #{tpu_custom_call.1} parent=1 // loop_footer
      %s19 = sadd.s32 1, %s15
    $region7: #{tpu_custom_call.1} parent=1 // loop_footer_branch
      %14 = sbr.rel target = $region3
    $region8: #{tpu_custom_call.1} parent=1 // loop_exit
      _
    %335 = vsyncpa [#allocation3], 1
    %s336 = scalar_lea.sflag [#allocation3], 1
    %337 = vsyncpa %s336, 1
    %338 = vsyncpa [#allocation4], 1
    %s339 = scalar_lea.sflag [#allocation4], 1
    %340 = vsyncpa %s339, 1

</llo_original>
